<compile_context>
chip_gen: v7x
topology: tpu7x:2x2x1
jax: 0.10.0
libtpu: 0.0.40
codegen_flags: <defaults>
</compile_context>

<pallas_src>
import numpy as np
import jax
import jax.numpy as jnp
from jax.experimental import pallas as pl
from jax.experimental.pallas import tpu as pltpu


def build_grid(resolution):
    """Standard slot-attention build_grid: [1, H, W, 2*len(resolution)] (numpy)."""
    ranges = [np.linspace(0.0, 1.0, num=r) for r in resolution]
    g = np.meshgrid(*ranges, sparse=False, indexing="ij")
    g = np.stack(g, axis=-1).reshape(resolution[0], resolution[1], -1)
    g = np.expand_dims(g, axis=0).astype(np.float32)
    return np.concatenate([g, 1.0 - g], axis=-1)  # [1, H, W, 4]


def prepare_soft_position_params(grid_nhwc, bias):
    """Module-init-time prep (hoisted out of the per-call path):
    grid^T as [Cin, HW] and bias as a [hid, 1] column."""
    g = np.asarray(grid_nhwc, dtype=np.float32)
    _, H, W, Cin = g.shape
    g_t = np.ascontiguousarray(g.reshape(H * W, Cin).T)       # [Cin, HW]
    b_col = np.asarray(bias, dtype=np.float32).reshape(-1, 1)  # [hid, 1]
    return jnp.asarray(g_t), jnp.asarray(b_col)


def _tpu_defaults():
    """Best-effort generation detection (safe fallbacks if unknown)."""
    kind = ""
    try:
        kind = jax.devices()[0].device_kind.lower()
    except Exception:
        pass
    # Chips with 2 TensorCores per chip need enough grid steps per core to pipeline.
    two_tc = any(tag in kind for tag in ("v7", "v5p", "v4"))
    # v5e has no bf16 VPU: keep the f32-accumulate add there.
    is_v5e = ("v5 lite" in kind) or ("v5e" in kind) or ("v5lite" in kind)
    bf16_vpu = not is_v5e
    return two_tc, bf16_vpu


def _soft_pos_embed_kernel_factory(native_add: bool):
    def kernel(g_ref, w_ref, b_ref, x_ref, o_ref):
        # g_ref: [Cin, hw_tile]   w_ref: [hid, Cin]   b_ref: [hid, 1]
        # x_ref / o_ref: [B, hid, hw_tile]
        emb_t = jnp.dot(w_ref[...], g_ref[...],
                        preferred_element_type=jnp.float32) + b_ref[...]   # [hid, hw_tile]
        if native_add:
            # bf16-capable VPU: cast the (small) embedding once, add in native dtype.
            o_ref[...] = x_ref[...] + emb_t.astype(o_ref.dtype)[None, :, :]
        else:
            # f32-accumulate path (matches the PyTorch f32 Linear + add exactly).
            o_ref[...] = (x_ref[...].astype(jnp.float32)
                          + emb_t[None, :, :]).astype(o_ref.dtype)
    return kernel


def _choose_hw_tile(HW, B, hid, itemsize, target_block_bytes, min_tiles):
    """Multiple-of-128 HW tile: as large as the byte target allows while keeping
    >= min_tiles grid steps (so each TensorCore has DMA to pipeline against)."""
    per_col = B * hid * itemsize                         # bytes per HW column of the x block
    hw_pad128 = -(-HW // 128) * 128                      # HW rounded up to 128
    max_by_bytes = max(128, (target_block_bytes // max(per_col * 128, 1)) * 128)
    if HW >= min_tiles * 128:
        max_by_steps = max(128, (HW // min_tiles // 128) * 128)
    else:
        max_by_steps = 128
    return int(min(max_by_bytes, max_by_steps, hw_pad128))


def soft_position_embed(inputs_nchw, g_t, weight, bias_col, *,
                        donate_input=False,
                        target_block_bytes=4 << 20,
                        xla_fallback_below_bytes=1 << 20,
                        native_dtype_add=None,
                        buffer_count=None):
    """inputs_nchw: [B, hid, H, W];  g_t: [Cin, H*W] (grid^T, from
    prepare_soft_position_params);  weight: [hid, Cin] (PyTorch Linear layout);
    bias_col: [hid, 1].  donate_input=True aliases x into the output (only safe if
    the caller never reads x afterwards)."""
    B, hid, H, W = inputs_nchw.shape
    Cin, HW = g_t.shape
    assert HW == H * W and weight.shape == (hid, Cin) and bias_col.shape == (hid, 1)

    # Tiny-problem gate: below ~1 MiB the pallas_call fixed cost + grid steps dwarf
    # the HBM traffic; a plain XLA fusion of dot + broadcast-add is at least as fast.
    x_bytes = B * hid * HW * inputs_nchw.dtype.itemsize
    if x_bytes < xla_fallback_below_bytes:
        emb_t = jnp.dot(weight, g_t, preferred_element_type=jnp.float32) + bias_col
        out = (inputs_nchw.reshape(B, hid, HW).astype(jnp.float32)
               + emb_t[None, :, :]).astype(inputs_nchw.dtype)
        return out.reshape(B, hid, H, W)

    two_tc, bf16_vpu = _tpu_defaults()
    if native_dtype_add is None:
        native_dtype_add = bool(bf16_vpu and inputs_nchw.dtype == jnp.bfloat16)
    min_tiles = 8 if two_tc else 4   # >= 3-4 pipelined steps per TensorCore

    # Free reshape only: NCHW stays NCHW with the two spatial dims merged.
    x = inputs_nchw.reshape(B, hid, HW)                        # [B, hid, HW]

    hw_tile = _choose_hw_tile(HW, B, hid, x.dtype.itemsize, target_block_bytes, min_tiles)
    n_tiles = -(-HW // hw_tile)
    HW_pad = hw_tile * n_tiles

    if HW_pad != HW:
        # Pad once in the wrapper (lane-aligned tiles everywhere); padded columns are
        # sliced off on return. Padded grid columns are never read back.
        x = jnp.pad(x, ((0, 0), (0, 0), (0, HW_pad - HW)))
        g_t = jnp.pad(g_t, ((0, 0), (0, HW_pad - HW)))

    # Explicit VMEM budget: 2x in + 2x out blocks plus tiny resident w/bias/grid tiles,
    # with headroom; capped at 48 MiB so it stays legal on v7x's 64 MiB physical VMEM.
    block_bytes = B * hid * hw_tile * x.dtype.itemsize
    resident_bytes = (hid * Cin + hid + 2 * Cin * hw_tile) * 4
    needed = 4 * block_bytes + 2 * resident_bytes
    vmem_limit = int(min(48 << 20, max(32 << 20, needed * 3 // 2)))

    xo_shape = (B, hid, hw_tile)
    xo_map = lambda j: (0, 0, j)
    if buffer_count is None:
        x_spec = pl.BlockSpec(xo_shape, xo_map)
        out_spec = pl.BlockSpec(xo_shape, xo_map)
    else:
        # Optional deeper pipelining sweep (e.g. 3 on v7x if the trace shows exposed DMA).
        x_spec = pl.BlockSpec(xo_shape, xo_map, pipeline_mode=pl.Buffered(buffer_count))
        out_spec = pl.BlockSpec(xo_shape, xo_map, pipeline_mode=pl.Buffered(buffer_count))

    out = pl.pallas_call(
        _soft_pos_embed_kernel_factory(native_dtype_add),
        out_shape=jax.ShapeDtypeStruct((B, hid, HW_pad), inputs_nchw.dtype),
        grid_spec=pltpu.PrefetchScalarGridSpec(
            num_scalar_prefetch=0,
            grid=(n_tiles,),
            in_specs=[
                pl.BlockSpec((Cin, hw_tile), lambda j: (0, j)),      # grid^T tile
                pl.BlockSpec((hid, Cin), lambda j: (0, 0)),          # weight (resident)
                pl.BlockSpec((hid, 1), lambda j: (0, 0)),            # bias (resident)
                x_spec,                                              # x tile
            ],
            out_specs=out_spec,
        ),
        compiler_params=pltpu.CompilerParams(
            dimension_semantics=("parallel",),
            vmem_limit_bytes=vmem_limit),
        input_output_aliases=({3: 0} if donate_input else {}),
    )(g_t, weight, bias_col, x)

    if HW_pad != HW:
        out = out[:, :, :HW]
    return out.reshape(B, hid, H, W)


if __name__ == "__main__":
    # Module-consistent small shapes:
    #   num_channels = 3 -> dense in_features = num_channels + 1 = 4 (= grid channels)
    #   hidden_size = 32, resolution = (16, 16), batch = 2
    num_channels = 3
    hidden_size = 32
    resolution = (16, 16)
    B = 2

    key = jax.random.PRNGKey(0)
    k_x, k_w, k_b = jax.random.split(key, 3)

    grid_buf = build_grid(resolution)                             # numpy [1, 16, 16, 4]
    Cin = num_channels + 1
    assert grid_buf.shape[-1] == Cin

    # Deterministic synthetic parameters (nn.Linear(Cin, hidden_size)).
    weight = jax.random.normal(k_w, (hidden_size, Cin), jnp.float32) * 0.1
    bias = jax.random.normal(k_b, (hidden_size,), jnp.float32) * 0.1

    # inputs: NCHW [B, hidden_size, H, W]
    x = jax.random.normal(k_x, (B, hidden_size, *resolution), jnp.float32)

    # Module-init-time prep (hoisted out of the per-call path).
    g_t, bias_col = prepare_soft_position_params(grid_buf, bias)

    # Force the Pallas path for this small demo shape (the default gate would route
    # <1 MiB problems to the plain XLA fusion).
    out = soft_position_embed(x, g_t, weight, bias_col, xla_fallback_below_bytes=0)
    out = jax.block_until_ready(out)

    # Reference (pure JAX) check of the exact PyTorch semantics.
    emb = jnp.dot(jnp.asarray(grid_buf), weight.T) + bias         # [1, H, W, hid]
    ref = x + jnp.transpose(emb, (0, 3, 1, 2))                    # broadcast over batch
    assert out.shape == x.shape
    assert jnp.allclose(out, ref, atol=1e-5, rtol=1e-5)

    # Also sanity-check the default-gated path (takes the small-problem XLA fallback here).
    out_small = jax.block_until_ready(soft_position_embed(x, g_t, weight, bias_col))
    assert jnp.allclose(out_small, ref, atol=1e-5, rtol=1e-5)

    print("KERNEL_OK")
</pallas_src>

<mosaic_0001>
module attributes {stable_mosaic.version = 11 : i64} {
  func.func @kernel(%arg0: i32, %arg1: memref<4x128xf32, #tpu.memory_space<vmem>>, %arg2: memref<32x4xf32, #tpu.memory_space<vmem>>, %arg3: memref<32x1xf32, #tpu.memory_space<vmem>>, %arg4: memref<2x32x128xf32, #tpu.memory_space<vmem>>, %arg5: memref<2x32x128xf32, #tpu.memory_space<vmem>>) attributes {dimension_semantics = [#tpu.dimension_semantics<parallel>], iteration_bounds = array<i64: 2>, scalar_prefetch = 0 : i64, scratch_operands = 0 : i64, tpu.core_type = #tpu.core_type<tc>, window_params = [{transform_indices = @transform_0, window_bounds = array<i64: 4, 128>}, {pipeline_mode = #tpu.pipeline_mode<synchronous>, transform_indices = @transform_1, window_bounds = array<i64: 32, 4>}, {pipeline_mode = #tpu.pipeline_mode<synchronous>, transform_indices = @transform_2, window_bounds = array<i64: 32, 1>}, {transform_indices = @transform_3, window_bounds = array<i64: 2, 32, 128>}, {transform_indices = @transform_4, window_bounds = array<i64: 2, 32, 128>}]} {
    %c0 = arith.constant 0 : index
    %c0_0 = arith.constant 0 : index
    %0 = vector.load %arg2[%c0, %c0_0] : memref<32x4xf32, #tpu.memory_space<vmem>>, vector<32x4xf32>
    %c0_1 = arith.constant 0 : index
    %c0_2 = arith.constant 0 : index
    %1 = vector.load %arg1[%c0_1, %c0_2] : memref<4x128xf32, #tpu.memory_space<vmem>>, vector<4x128xf32>
    %cst = arith.constant dense<0.000000e+00> : vector<32x128xf32>
    %2 = tpu.matmul %0, %1, %cst {dimension_numbers = #tpu.dot_dimension_numbers<[1], [0], [0], [1], [0, 0, 1, 1], [], []>} : vector<32x4xf32>, vector<4x128xf32>, vector<32x128xf32> -> vector<32x128xf32>
    %c0_3 = arith.constant 0 : index
    %c0_4 = arith.constant 0 : index
    %3 = vector.load %arg3[%c0_3, %c0_4] : memref<32x1xf32, #tpu.memory_space<vmem>>, vector<32x1xf32>
    %4 = vector.broadcast %3 : vector<32x1xf32> to vector<32x128xf32>
    %5 = arith.addf %2, %4 : vector<32x128xf32>
    %c0_5 = arith.constant 0 : index
    %c0_6 = arith.constant 0 : index
    %c0_7 = arith.constant 0 : index
    %6 = vector.load %arg4[%c0_5, %c0_6, %c0_7] : memref<2x32x128xf32, #tpu.memory_space<vmem>>, vector<2x32x128xf32>
    %7 = vector.shape_cast %5 : vector<32x128xf32> to vector<1x32x128xf32>
    %8 = vector.broadcast %7 : vector<1x32x128xf32> to vector<2x32x128xf32>
    %9 = arith.addf %6, %8 : vector<2x32x128xf32>
    %c0_8 = arith.constant 0 : index
    %c0_9 = arith.constant 0 : index
    %c0_10 = arith.constant 0 : index
    %10 = vector.load %arg5[%c0_8, %c0_9, %c0_10] : memref<2x32x128xf32, #tpu.memory_space<vmem>>, vector<2x32x128xf32>
    tpu.vector_store %arg5[%c0_8, %c0_9, %c0_10], %9 {strides = array<i32>} : memref<2x32x128xf32, #tpu.memory_space<vmem>>, vector<2x32x128xf32>,
    return
  }
  func.func @transform_0(%arg0: i32) -> (i32, i32) {
    %c0_i32 = arith.constant 0 : i32
    %c0_i32_0 = arith.constant 0 : i32
    return %c0_i32, %arg0 : i32, i32
  }
  func.func @transform_1(%arg0: i32) -> (i32, i32) {
    %c0_i32 = arith.constant 0 : i32
    %c0_i32_0 = arith.constant 0 : i32
    %c0_i32_1 = arith.constant 0 : i32
    return %c0_i32, %c0_i32_0 : i32, i32
  }
  func.func @transform_2(%arg0: i32) -> (i32, i32) {
    %c0_i32 = arith.constant 0 : i32
    %c0_i32_0 = arith.constant 0 : i32
    %c0_i32_1 = arith.constant 0 : i32
    return %c0_i32, %c0_i32_0 : i32, i32
  }
  func.func @transform_3(%arg0: i32) -> (i32, i32, i32) {
    %c0_i32 = arith.constant 0 : i32
    %c0_i32_0 = arith.constant 0 : i32
    %c0_i32_1 = arith.constant 0 : i32
    return %c0_i32, %c0_i32_0, %arg0 : i32, i32, i32
  }
  func.func @transform_4(%arg0: i32) -> (i32, i32, i32) {
    %c0_i32 = arith.constant 0 : i32
    %c0_i32_0 = arith.constant 0 : i32
    %c0_i32_1 = arith.constant 0 : i32
    return %c0_i32, %c0_i32_0, %arg0 : i32, i32, i32
  }
}

</mosaic_0001>

<llo_original>
// kernel: tpu_custom_call.1
$region0: #{tpu_custom_call.1}
  #allocation0 [shape = 'u32[]', space=smem, size = 0x4, offset = 0x4, fixed_abs, tag = 'smem constant byte address 0x4 - core index']
  #allocation1 [shape = 'u32[144,128]{1,0:T(1,128)}', space=vmem, size = 0x12000, scoped, tag = 'internal scratch']
  %s0 = inlined_call_operand.vmem [shape: f32[4,256], index: 0, kind: input, shape index: {}]
  %s1 = inlined_call_operand.vmem [shape: f32[32,4], index: 1, kind: input, shape index: {}]
  %s2 = inlined_call_operand.vmem [shape: f32[32,1], index: 2, kind: input, shape index: {}]
  %s3 = inlined_call_operand.hbm [shape: f32[2,32,256], index: 3, kind: input, shape index: {}]
  %s4 = inlined_call_operand.hbm [shape: f32[2,32,256], index: 4, kind: output, shape index: {}]
  %s5 = sld [smem:[#allocation0]]
  $region53: #{tpu_custom_call.1} parent=0
    _
  %s7 = ssub.s32 1, %s5
  %s8 = scalar_select 0, %s7, %s5
  $region1: #{tpu_custom_call.1} parent=0
    #allocation2 [shape = 'u8[65536]{0}', space=vmem, size = 0x10000, scoped, tag = 'input window, operand 3']
    #allocation3 [shape = 's32[2]{0}', space=sflag, size = 0x8, scoped, tag = 'scoped memory for tpu_custom_call.1']
    #allocation4 [shape = 's32[2]{0}', space=sflag, size = 0x8, scoped, tag = 'scoped memory for tpu_custom_call.1']
    #allocation5 [shape = 'u8[65536]{0}', space=vmem, size = 0x10000, scoped, tag = 'output window, operand 0']
    %9 = vsyncpa [#allocation3], 0
    %s10 = scalar_lea.sflag [#allocation3], 1
    %11 = vsyncpa %s10, 0
    %12 = vsyncpa [#allocation4], 0
    %s13 = scalar_lea.sflag [#allocation4], 1
    %14 = vsyncpa %s13, 0
    loop: start=0, step=1, limit=4
    $region2: #{tpu_custom_call.1} parent=1 // loop_pre_header
      _
    $region3: #{tpu_custom_call.1} parent=1 // loop_header
      %s16 = sphi 0, %s20
      %p17 = scmp.ge.s32.totalorder %s16, 4
      %s26 = sphi 0, %s28
      %s29 = sphi 0, %s26
      %s30 = sphi 0, %s29
      %s46 = sphi 0, %s30
      %s50 = sphi 0, %s50
      %s52 = sphi 0, %s50
      %s53 = sphi 0, %s52
      %s67 = sphi 0, %s53
      %s71 = sphi 0, %s71
      %s73 = sphi 0, %s71
      %s74 = sphi 0, %s73
      %s88 = sphi 0, %s74
      %s94 = sphi 0, %s96
      %s97 = sphi 0, %s94
      %s98 = sphi 0, %s97
      %s114 = sphi 0, %s98
      %s120 = sphi 0, %s122
      %s123 = sphi 0, %s120
      %s124 = sphi 0, %s123
      %s140 = sphi 0, %s124
    $region4: #{tpu_custom_call.1} parent=1 // loop_header_branch
      %19 = sbr.rel (%p17) target = $region8
    $region5: #{tpu_custom_call.1} parent=1 // loop_body
      %s21 = ssub.s32 %s16, 1
      %s22 = ssub.s32 %s16, 2
      %s23 = sadd.s32 %s16, 1
      %s24 = ssub.s32 %s16, %s23
      %p25 = scmp.eq.s32.totalorder %s24, 0
      %s27 = sadd.s32 %s26, 1
      %s28 = scalar_select %p25, %s26, %s27
      %p31 = pneg %p25
      %p32 = scmp.eq.s32.totalorder %s16, 1
      %p33 = por %p31, %p32
      %p34 = scmp.ne.s32.totalorder %s26, %s29
      %p35 = scmp.eq.s32.totalorder %s16, 0
      %p36 = por %p34, %p35
      %p37 = scmp.ne.s32.totalorder %s26, %s29
      %p38 = scmp.eq.s32.totalorder %s21, 1
      %p39 = por %p37, %p38
      %p40 = scmp.ne.s32.totalorder %s29, %s30
      %p41 = scmp.eq.s32.totalorder %s21, 0
      %p42 = por %p40, %p41
      %p43 = scmp.ne.s32.totalorder %s29, %s30
      %p44 = scmp.eq.s32.totalorder %s22, 1
      %p45 = por %p43, %p44
      %p47 = scmp.ne.s32.totalorder %s30, %s46
      %p48 = scmp.eq.s32.totalorder %s22, 0
      %p49 = por %p47, %p48
      %s51 = sadd.s32 %s50, 1
      %p54 = scmp.eq.s32.totalorder %s16, 1
      %p55 = scmp.ne.s32.totalorder %s50, %s52
      %p56 = scmp.eq.s32.totalorder %s16, 0
      %p57 = por %p55, %p56
      %p58 = scmp.ne.s32.totalorder %s50, %s52
      %p59 = scmp.eq.s32.totalorder %s21, 1
      %p60 = por %p58, %p59
      %p61 = scmp.ne.s32.totalorder %s52, %s53
      %p62 = scmp.eq.s32.totalorder %s21, 0
      %p63 = por %p61, %p62
      %p64 = scmp.ne.s32.totalorder %s52, %s53
      %p65 = scmp.eq.s32.totalorder %s22, 1
      %p66 = por %p64, %p65
      %p68 = scmp.ne.s32.totalorder %s53, %s67
      %p69 = scmp.eq.s32.totalorder %s22, 0
      %p70 = por %p68, %p69
      %s72 = sadd.s32 %s71, 1
      %p75 = scmp.eq.s32.totalorder %s16, 1
      %p76 = scmp.ne.s32.totalorder %s71, %s73
      %p77 = scmp.eq.s32.totalorder %s16, 0
      %p78 = por %p76, %p77
      %p79 = scmp.ne.s32.totalorder %s71, %s73
      %p80 = scmp.eq.s32.totalorder %s21, 1
      %p81 = por %p79, %p80
      %p82 = scmp.ne.s32.totalorder %s73, %s74
      %p83 = scmp.eq.s32.totalorder %s21, 0
      %p84 = por %p82, %p83
      %p85 = scmp.ne.s32.totalorder %s73, %s74
      %p86 = scmp.eq.s32.totalorder %s22, 1
      %p87 = por %p85, %p86
      %p89 = scmp.ne.s32.totalorder %s74, %s88
      %p90 = scmp.eq.s32.totalorder %s22, 0
      %p91 = por %p89, %p90
      %s92 = ssub.s32 %s16, %s23
      %p93 = scmp.eq.s32.totalorder %s92, 0
      %s95 = sadd.s32 %s94, 1
      %s96 = scalar_select %p93, %s94, %s95
      %p99 = pneg %p93
      %p100 = scmp.eq.s32.totalorder %s16, 1
      %p101 = por %p99, %p100
      %p102 = scmp.ne.s32.totalorder %s94, %s97
      %p103 = scmp.eq.s32.totalorder %s16, 0
      %p104 = por %p102, %p103
      %p105 = scmp.ne.s32.totalorder %s94, %s97
      %p106 = scmp.eq.s32.totalorder %s21, 1
      %p107 = por %p105, %p106
      %p108 = scmp.ne.s32.totalorder %s97, %s98
      %p109 = scmp.eq.s32.totalorder %s21, 0
      %p110 = por %p108, %p109
      %p111 = scmp.ne.s32.totalorder %s97, %s98
      %p112 = scmp.eq.s32.totalorder %s22, 1
      %p113 = por %p111, %p112
      %p115 = scmp.ne.s32.totalorder %s98, %s114
      %p116 = scmp.eq.s32.totalorder %s22, 0
      %p117 = por %p115, %p116
      %s118 = ssub.s32 %s16, %s23
      %p119 = scmp.eq.s32.totalorder %s118, 0
      %s121 = sadd.s32 %s120, 1
      %s122 = scalar_select %p119, %s120, %s121
      %p125 = pneg %p119
      %p126 = scmp.eq.s32.totalorder %s16, 1
      %p127 = por %p125, %p126
      %p128 = scmp.ne.s32.totalorder %s120, %s123
      %p129 = scmp.eq.s32.totalorder %s16, 0
      %p130 = por %p128, %p129
      %p131 = scmp.ne.s32.totalorder %s120, %s123
      %p132 = scmp.eq.s32.totalorder %s21, 1
      %p133 = por %p131, %p132
      %p134 = scmp.ne.s32.totalorder %s123, %s124
      %p135 = scmp.eq.s32.totalorder %s21, 0
      %p136 = por %p134, %p135
      %p137 = scmp.ne.s32.totalorder %s123, %s124
      %p138 = scmp.eq.s32.totalorder %s22, 1
      %p139 = por %p137, %p138
      %p141 = scmp.ne.s32.totalorder %s124, %s140
      %p142 = scmp.eq.s32.totalorder %s22, 0
      %p143 = por %p141, %p142
      %p144 = scmp.le.s32.totalorder 1, %s16
      %p145 = scmp.lt.s32.totalorder %s16, 3
      %p146 = pnand %p144, %p145
      %p147 = pneg %p146
      // Predicated region
      $region9: #{tpu_custom_call.1} parent=5 // pred_check
        _
      $region10: #{tpu_custom_call.1} parent=5 // pred_check_branch
        %149 = sbr.rel (%p146) target = $region12
      $region11: #{tpu_custom_call.1} parent=5 // pred_region
        %s150 = ssub.s32 %s16, 1
        // Predicated region
        $region13: #{tpu_custom_call.1} parent=11 // pred_check
          %p151 = pneg %p63
        $region14: #{tpu_custom_call.1} parent=11 // pred_check_branch
          %153 = sbr.rel (%p151) target = $region16
        $region15: #{tpu_custom_call.1} parent=11 // pred_region
          _
        $region16: #{tpu_custom_call.1} parent=11 // pred_fallthru
          _
        // Predicated region
        $region17: #{tpu_custom_call.1} parent=11 // pred_check
          %p154 = pneg %p84
        $region18: #{tpu_custom_call.1} parent=11 // pred_check_branch
          %156 = sbr.rel (%p154) target = $region20
        $region19: #{tpu_custom_call.1} parent=11 // pred_region
          _
        $region20: #{tpu_custom_call.1} parent=11 // pred_fallthru
          _
      $region12: #{tpu_custom_call.1} parent=5 // pred_fallthru
        _
      %p157 = scmp.lt.s32.totalorder %s16, 2
      // Predicated region
      $region21: #{tpu_custom_call.1} parent=5 // pred_check
        %p158 = pneg %p157
      $region22: #{tpu_custom_call.1} parent=5 // pred_check_branch
        %160 = sbr.rel (%p158) target = $region24
      $region23: #{tpu_custom_call.1} parent=5 // pred_region
        // Predicated region
        $region25: #{tpu_custom_call.1} parent=23 // pred_check
          %p161 = pneg %p36
        $region26: #{tpu_custom_call.1} parent=23 // pred_check_branch
          %163 = sbr.rel (%p161) target = $region28
        $region27: #{tpu_custom_call.1} parent=23 // pred_region
          %p164 = scmp.lt.s32.totalorder %s16, 1
          %s165 = scalar_select %p164, %s16, 1
          %s166 = smul.addr %s165, 4
          %s167 = scalar_lea.vmem %s0, %s166
        $region28: #{tpu_custom_call.1} parent=23 // pred_fallthru
          _
        // Predicated region
        $region29: #{tpu_custom_call.1} parent=23 // pred_check
          %p168 = pneg %p104
        $region30: #{tpu_custom_call.1} parent=23 // pred_check_branch
          %170 = sbr.rel (%p168) target = $region32
        $region31: #{tpu_custom_call.1} parent=23 // pred_region
          %s171 = sand.u32 %s94, 1
          %s172 = scalar_lea.sflag [#allocation3], %s171
          %s173 = sand.u32 %s94, 1
          %s174 = smul.addr %s173, 64
          %s175 = scalar_lea.vmem [#allocation2], %s174
          %s177 = ssub.s32 1024, 1024
          %178 = vsyncadd %s172, %s177
          %s179 = smul.addr %s16, 128
          %s180 = scalar_lea.hbm %s3, %s179
          %s181 = sshll.u32 %s175, 4
          %s182 = int_to_ptr.vmem [resolvable:$true] %s181
          %187 = dma.hbm_to_vmem [thread:$0]  %s180, 1024, %s182, %s172, 256, 128, 8
        $region32: #{tpu_custom_call.1} parent=23 // pred_fallthru
          _
      $region24: #{tpu_custom_call.1} parent=5 // pred_fallthru
        _
      %p188 = scmp.le.s32.totalorder 1, %s16
      %p189 = scmp.lt.s32.totalorder %s16, 3
      %p190 = pnand %p188, %p189
      %p191 = pneg %p190
      // Predicated region
      $region33: #{tpu_custom_call.1} parent=5 // pred_check
        _
      $region34: #{tpu_custom_call.1} parent=5 // pred_check_branch
        %193 = sbr.rel (%p190) target = $region36
      $region35: #{tpu_custom_call.1} parent=5 // pred_region
        %s194 = ssub.s32 %s16, 1
        %s195 = sand.u32 %s97, 1
        %s196 = scalar_lea.sflag [#allocation3], %s195
        %s197 = sand.u32 %s97, 1
        %s198 = smul.addr %s197, 64
        %s199 = scalar_lea.vmem [#allocation2], %s198
        // Predicated region
        $region37: #{tpu_custom_call.1} parent=35 // pred_check
          %p200 = pneg %p110
        $region38: #{tpu_custom_call.1} parent=35 // pred_check_branch
          %202 = sbr.rel (%p200) target = $region40
        $region39: #{tpu_custom_call.1} parent=35 // pred_region
          %203 = dma.done %s196, 1024
        $region40: #{tpu_custom_call.1} parent=35 // pred_fallthru
          _
        %p204 = scmp.lt.s32.totalorder %s21, 1
        %s205 = scalar_select %p204, %s21, 1
        %s206 = smul.addr %s205, 4
        %s207 = scalar_lea.vmem %s0, %s206
        %p208 = pneg %p42
        %p209 = pneg %p39
        %p210 = pneg %p63
        %p211 = pneg %p60
        %p212 = pneg %p84
        %p213 = pneg %p81
        %s214 = sand.u32 %s97, 1
        %s215 = scalar_lea.sflag [#allocation3], %s214
        %s216 = sand.u32 %s97, 1
        %s217 = smul.addr %s216, 64
        %s218 = scalar_lea.vmem [#allocation2], %s217
        %p219 = pneg %p110
        %p220 = pneg %p107
        %p221 = pneg %p136
        %p222 = pneg %p133
        %s223 = sand.u32 %s123, 1
        %s224 = scalar_lea.sflag [#allocation4], %s223
        %s225 = sand.u32 %s123, 1
        %s226 = smul.addr %s225, 64
        %s227 = scalar_lea.vmem [#allocation5], %s226
        %p228 = scmp.lt.s32.totalorder %s21, 1
        %s229 = scalar_select %p228, %s21, 1
        %s230 = smul.addr %s229, 4
        %s231 = scalar_lea.vmem %s0, %s230
        %v232 = vld [vmem:[%s1] sm:$0xff]
        %v233 = vld [vmem:[%s1 + $0x8] sm:$0xff]
        %v234 = vld [vmem:[%s1 + $0x10] sm:$0xff]
        %v235 = vld [vmem:[%s1 + $0x18] sm:$0xff]
        %v236 = vld [vmem:[%s231] sm:$0xf]
        %v237 = vld [vmem:[%s2] sm:$0xff]
        %v238 = vld [vmem:[%s2 + $0x8] sm:$0xff]
        %v239 = vld [vmem:[%s2 + $0x10] sm:$0xff]
        %v240 = vld [vmem:[%s2 + $0x18] sm:$0xff]
        %242 = vset.pattern.permute.xlu0 0
        %243 = vperm.xlu0 %242, %v237
        %v244 = vpop.permute.xlu0 %243
        %247 = vset.pattern.permute.xlu0 0
        %248 = vperm.xlu0 %247, %v238
        %v249 = vpop.permute.xlu0 %248
        %252 = vset.pattern.permute.xlu0 0
        %253 = vperm.xlu0 %252, %v239
        %v254 = vpop.permute.xlu0 %253
        %257 = vset.pattern.permute.xlu0 0
        %258 = vperm.xlu0 %257, %v240
        %v259 = vpop.permute.xlu0 %258
        %vm261 = vcmask 31744
        %v263 = vsel %vm261, %v232, 0
        %v266 = vsel %vm261, %v233, 0
        %v269 = vsel %vm261, %v234, 0
        %v272 = vsel %vm261, %v235, 0
        %vm274 = vcmask 1043456
        %v276 = vsel %vm274, %v236, 0
        %278 = vmatprep.subr.mxu0 0.0
        %279 = vmatpush1.msra.mxu0 %v276
        %280 = vmatprep.subr.mxu0 0.0
        %281 = vmatpush1.msra.mxu0 0.0
        %282 = vmatprep.subr.mxu0 0.0
        %283 = vmatpush1.msra.mxu0 0.0
        %284 = vmatprep.subr.mxu0 0.0
        %285 = vmatpush1.msra.mxu0 0.0
        %286 = vmatprep.subr.mxu0 0.0
        %287 = vmatpush1.msra.mxu0 0.0
        %288 = vmatprep.subr.mxu0 0.0
        %289 = vmatpush1.msra.mxu0 0.0
        %290 = vmatprep.subr.mxu0 0.0
        %291 = vmatpush1.msra.mxu0 0.0
        %292 = vmatprep.subr.mxu0 0.0
        %293 = vmatpush1.msra.mxu0 0.0
        %294 = vmatprep.subr.mxu0 0.0
        %295 = vmatpush1.msra.mxu0 0.0
        %296 = vmatprep.subr.mxu0 0.0
        %297 = vmatpush1.msra.mxu0 0.0
        %298 = vmatprep.subr.mxu0 0.0
        %299 = vmatpush1.msra.mxu0 0.0
        %300 = vmatprep.subr.mxu0 0.0
        %301 = vmatpush1.msra.mxu0 0.0
        %302 = vmatprep.subr.mxu0 0.0
        %303 = vmatpush1.msra.mxu0 0.0
        %304 = vmatprep.subr.mxu0 0.0
        %305 = vmatpush1.msra.mxu0 0.0
        %306 = vmatprep.subr.mxu0 0.0
        %307 = vmatpush1.msra.mxu0 0.0
        %308 = vmatprep.subr.mxu0 0.0
        %309 = vmatpush1.msra.mxu0 0.0
        %310 = vmatprep.subr.mxu0 0.0
        %311 = vmatpush1.msra.mxu0 0.0
        %312 = vmatprep.subr.mxu0 0.0
        %313 = vmatpush1.msra.mxu0 0.0
        %314 = vmatprep.subr.mxu0 0.0
        %315 = vmatpush1.msra.mxu0 0.0
        %316 = vmatprep.subr.mxu0 0.0
        %317 = vmatpush1.msra.mxu0 0.0
        %318 = vmatprep.subr.mxu0 0.0
        %319 = vmatpush1.msra.mxu0 0.0
        %320 = vmatprep.subr.mxu0 0.0
        %321 = vmatpush1.msra.mxu0 0.0
        %322 = vmatprep.subr.mxu0 0.0
        %323 = vmatpush1.msra.mxu0 0.0
        %324 = vmatprep.subr.mxu0 0.0
        %325 = vmatpush1.msra.mxu0 0.0
        %326 = vmatprep.subr.mxu0 0.0
        %327 = vmatpush1.msra.mxu0 0.0
        %328 = vmatprep.subr.mxu0 0.0
        %329 = vmatpush1.msra.mxu0 0.0
        %330 = vmatprep.subr.mxu0 0.0
        %331 = vmatpush1.msra.mxu0 0.0
        %332 = vmatprep.subr.mxu0 0.0
        %333 = vmatpush1.msra.mxu0 0.0
        %334 = vmatprep.subr.mxu0 0.0
        %335 = vmatpush1.msra.mxu0 0.0
        %336 = vmatprep.subr.mxu0 0.0
        %337 = vmatpush1.msra.mxu0 0.0
        %338 = vmatprep.subr.mxu0 0.0
        %339 = vmatpush1.msra.mxu0 0.0
        %340 = vmatprep.subr.mxu0 0.0
        %341 = vmatpush1.msra.mxu0 0.0
        %342 = vmatprep.mubr.f32.mxu0 0.0
        %343 = vmatmul.mubr.f32.gmra.mrb[0].mxu0 %v263
        %v344 = vpop.f32.mrb[0].mxu0
        %v345 = vadd.f32 %v244, %v344
        %v346 = vpop.f32.mrb[0].mxu0
        %347 = vmatprep.mubr.f32.mxu0 0.0
        %348 = vmatmul.mubr.f32.gmra.mrb[0].mxu0 %v266
        %v349 = vpop.f32.mrb[0].mxu0
        %v350 = vadd.f32 %v249, %v349
        %v351 = vpop.f32.mrb[0].mxu0
        %352 = vmatprep.mubr.f32.mxu0 0.0
        %353 = vmatmul.mubr.f32.gmra.mrb[0].mxu0 %v269
        %v354 = vpop.f32.mrb[0].mxu0
        %v355 = vadd.f32 %v254, %v354
        %v356 = vpop.f32.mrb[0].mxu0
        %357 = vmatprep.mubr.f32.mxu0 0.0
        %358 = vmatmul.mubr.f32.gmra.mrb[0].mxu0 %v272
        %v359 = vpop.f32.mrb[0].mxu0
        %v360 = vadd.f32 %v259, %v359
        %v361 = vpop.f32.mrb[0].mxu0
        %362 = vdwg.mxu0
        %v363 = vld [vmem:[%s199] sm:$0xff]
        %v364 = vld [vmem:[%s199 + $0x8] sm:$0xff]
        %v365 = vld [vmem:[%s199 + $0x10] sm:$0xff]
        %v366 = vld [vmem:[%s199 + $0x18] sm:$0xff]
        %v367 = vld [vmem:[%s199 + $0x20] sm:$0xff]
        %v368 = vld [vmem:[%s199 + $0x28] sm:$0xff]
        %v369 = vld [vmem:[%s199 + $0x30] sm:$0xff]
        %v370 = vld [vmem:[%s199 + $0x38] sm:$0xff]
        %v371 = vadd.f32 %v363, %v345
        %v372 = vadd.f32 %v364, %v350
        %v373 = vadd.f32 %v365, %v355
        %v374 = vadd.f32 %v366, %v360
        %v375 = vadd.f32 %v367, %v345
        %v376 = vadd.f32 %v368, %v350
        %v377 = vadd.f32 %v369, %v355
        %v378 = vadd.f32 %v370, %v360
        %379 = vst [vmem:[%s227] sm:$0xff] %v371
        %380 = vst [vmem:[%s227 + $0x8] sm:$0xff] %v372
        %381 = vst [vmem:[%s227 + $0x10] sm:$0xff] %v373
        %382 = vst [vmem:[%s227 + $0x18] sm:$0xff] %v374
        %383 = vst [vmem:[%s227 + $0x20] sm:$0xff] %v375
        %384 = vst [vmem:[%s227 + $0x28] sm:$0xff] %v376
        %385 = vst [vmem:[%s227 + $0x30] sm:$0xff] %v377
        %386 = vst [vmem:[%s227 + $0x38] sm:$0xff] %v378
        %s387 = sand.u32 %s123, 1
        %s388 = scalar_lea.sflag [#allocation4], %s387
        %s389 = sand.u32 %s123, 1
        %s390 = smul.addr %s389, 64
        %s391 = scalar_lea.vmem [#allocation5], %s390
        // Predicated region
        $region41: #{tpu_custom_call.1} parent=35 // pred_check
          %p392 = pneg %p133
        $region42: #{tpu_custom_call.1} parent=35 // pred_check_branch
          %394 = sbr.rel (%p392) target = $region44
        $region43: #{tpu_custom_call.1} parent=35 // pred_region
          %s396 = ssub.s32 1024, 1024
          %397 = vsyncadd %s388, %s396
          %s398 = smul.addr %s21, 128
          %s399 = scalar_lea.hbm %s4, %s398
          %s400 = sshll.u32 %s391, 4
          %s401 = int_to_ptr.vmem [resolvable:$true] %s400
          %406 = dma.vmem_to_hbm [thread:$0]  %s401, 1024, %s399, %s388, 128, 256, 8
        $region44: #{tpu_custom_call.1} parent=35 // pred_fallthru
          _
      $region36: #{tpu_custom_call.1} parent=5 // pred_fallthru
        _
      %p407 = scmp.le.s32.totalorder 2, %s16
      // Predicated region
      $region45: #{tpu_custom_call.1} parent=5 // pred_check
        %p408 = pneg %p407
      $region46: #{tpu_custom_call.1} parent=5 // pred_check_branch
        %410 = sbr.rel (%p408) target = $region48
      $region47: #{tpu_custom_call.1} parent=5 // pred_region
        %s411 = ssub.s32 %s16, 2
        // Predicated region
        $region49: #{tpu_custom_call.1} parent=47 // pred_check
          %p412 = pneg %p139
        $region50: #{tpu_custom_call.1} parent=47 // pred_check_branch
          %414 = sbr.rel (%p412) target = $region52
        $region51: #{tpu_custom_call.1} parent=47 // pred_region
          %s415 = sand.u32 %s124, 1
          %s416 = scalar_lea.sflag [#allocation4], %s415
          %s417 = sand.u32 %s124, 1
          %s418 = smul.addr %s417, 64
          %s419 = scalar_lea.vmem [#allocation5], %s418
          %420 = dma.done %s416, 1024
        $region52: #{tpu_custom_call.1} parent=47 // pred_fallthru
          _
      $region48: #{tpu_custom_call.1} parent=5 // pred_fallthru
        _
    $region6: #{tpu_custom_call.1} parent=1 // loop_footer
      %s20 = sadd.s32 1, %s16
    $region7: #{tpu_custom_call.1} parent=1 // loop_footer_branch
      %15 = sbr.rel target = $region3
    $region8: #{tpu_custom_call.1} parent=1 // loop_exit
      _
    %421 = vsyncpa [#allocation3], 1
    %s422 = scalar_lea.sflag [#allocation3], 1
    %423 = vsyncpa %s422, 1
    %424 = vsyncpa [#allocation4], 1
    %s425 = scalar_lea.sflag [#allocation4], 1
    %426 = vsyncpa %s425, 1

</llo_original>
